<compile_context>
chip_gen: v7x
topology: tpu7x:2x2x1
jax: 0.10.0
libtpu: 0.0.40
codegen_flags: <defaults>
</compile_context>

<pallas_src>
import functools

import jax
import jax.numpy as jnp
from jax import lax
from jax.experimental import pallas as pl
from jax.experimental.pallas import tpu as pltpu

LANES = 128
EPS = 1e-6


def _charbonnier_sum_kernel(
    x_ref, y_ref, out_ref, acc_ref, *,
    n_inner, tiles_total, tile_rows, acc_rows, reshape_fold,
    valid_last_rows, mask_needed,
):
    c = pl.program_id(0)  # parallel slice (splits across TCs on v7x)
    i = pl.program_id(1)  # sequential reduction within the slice

    @pl.when(i == 0)
    def _():
        acc_ref[...] = jnp.zeros_like(acc_ref)

    x = x_ref[...].astype(jnp.float32)
    y = y_ref[...].astype(jnp.float32)
    diff = x - y
    t = diff * diff + jnp.float32(EPS)
    err = t * lax.rsqrt(t)  # == sqrt(t) since t >= 1e-6; stays on the EUP

    def fold(e):
        if reshape_fold:
            if tile_rows > acc_rows:
                # Multiple independent accumulator rows -> VALU-only adds with
                # a broken dependency chain (acc_rows//8 independent vregs/lane).
                acc_ref[...] += e.reshape(
                    tile_rows // acc_rows, acc_rows, LANES).sum(axis=0)
            else:
                acc_ref[...] += e
        else:
            # Tiny / sublane-unaligned single tile: one XLU row-reduce.
            acc_ref[pl.ds(0, 1), :] += e.sum(axis=0, keepdims=True)

    if not mask_needed:
        fold(err)
    else:
        b = c * n_inner + i  # raw (unclamped) tile id, local-scale int32

        @pl.when(b < tiles_total - 1)
        def _():
            # Steady-state tiles take the clean unmasked path.
            fold(err)

        @pl.when(b == tiles_total - 1)
        def _():
            # Only the (possibly ragged) last real tile pays for iota+select.
            row_ids = lax.broadcasted_iota(jnp.int32, (tile_rows, LANES), 0)
            fold(jnp.where(row_ids < jnp.int32(valid_last_rows),
                           err, jnp.float32(0.0)))
        # Dead clamped tiles (b >= tiles_total) contribute nothing.

    @pl.when(i == n_inner - 1)
    def _():
        out_ref[...] = acc_ref[...]


def _device_defaults():
    """(tile_rows, num_slices) keyed off the local TPU generation."""
    kind = ""
    try:
        kind = jax.devices()[0].device_kind.lower()
    except Exception:
        pass
    if "v7" in kind:
        # 2 TensorCores/chip, 3.2 TB/s HBM: 4 MiB f32 blocks, split across TCs.
        return 8192, 2
    # v5e/v6e: one TensorCore. 2 MiB f32 blocks already amortize per-step
    # overhead; num_slices=1 keeps the unmasked path and a single partial block.
    return 4096, 1


def l1_charbonnier_loss(x, y, *, tile_rows=None, num_slices=None):
    """Pallas TPU implementation of L1_Charbonnier_Loss.forward(x, y)."""
    assert x.shape == y.shape, "x and y must have the same shape"
    n_total = int(x.size)
    assert n_total > 0

    if tile_rows is None or num_slices is None:
        d_rows, d_slices = _device_defaults()
        tile_rows = d_rows if tile_rows is None else tile_rows
        num_slices = d_slices if num_slices is None else num_slices

    xf = x.reshape(-1)
    yf = y.reshape(-1)

    rows = n_total // LANES
    rem = n_total - rows * LANES

    if rem:
        # TODO(synk): when n % 128 != 0, the slices below make XLA materialize
        # near-full HBM copies of x and y before the kernel (~2-3x traffic for
        # this memory-bound op); a fully fused path would need a manual-DMA
        # (memory_space=pl.ANY) tail handler. The common aligned case is free.
        xt = xf[rows * LANES:].astype(jnp.float32)
        yt = yf[rows * LANES:].astype(jnp.float32)
        dt = xt - yt
        tail_sum = jnp.sum(jnp.sqrt(dt * dt + jnp.float32(EPS)))
        x_main = xf[: rows * LANES]
        y_main = yf[: rows * LANES]
    else:
        tail_sum = jnp.float32(0.0)
        x_main = xf
        y_main = yf

    if rows == 0:  # degenerate tiny input (< 128 elements)
        return tail_sum / jnp.float32(n_total)

    x2 = x_main.reshape(rows, LANES)  # free reshape in the aligned case
    y2 = y_main.reshape(rows, LANES)

    # ---- static tile geometry ----
    itemsize = max(1, jnp.dtype(x2.dtype).itemsize)
    # Round to 32 rows: covers f32(8)/bf16(16)/int8(32) sublane packing and
    # keeps the 32-row accumulator fold exact.
    round_to = 32
    tile_rows = max(round_to, (int(tile_rows) // round_to) * round_to)
    tile_rows_eff = tile_rows if rows >= tile_rows else rows
    tiles_total = pl.cdiv(rows, tile_rows_eff)
    num_slices = max(1, min(int(num_slices), tiles_total))
    n_inner = pl.cdiv(tiles_total, num_slices)
    valid_last_rows = rows - (tiles_total - 1) * tile_rows_eff
    mask_needed = (valid_last_rows != tile_rows_eff) or (
        num_slices * n_inner != tiles_total)

    if tile_rows_eff % 32 == 0:
        acc_rows, reshape_fold = 32, True
    elif tile_rows_eff % 8 == 0:
        acc_rows, reshape_fold = 8, True
    else:
        acc_rows, reshape_fold = 8, False  # tiny unaligned single tile

    kernel = functools.partial(
        _charbonnier_sum_kernel,
        n_inner=n_inner,
        tiles_total=tiles_total,
        tile_rows=tile_rows_eff,
        acc_rows=acc_rows,
        reshape_fold=reshape_fold,
        valid_last_rows=valid_last_rows,
        mask_needed=mask_needed,
    )

    def in_map(c, i):
        # Dead tiles (only when num_slices doesn't divide tiles_total) are
        # clamped onto the last real tile; their contribution is skipped.
        return (jnp.minimum(c * n_inner + i, tiles_total - 1), 0)

    block_bytes = tile_rows_eff * LANES * itemsize
    f32_block_bytes = tile_rows_eff * LANES * 4
    # 2 inputs x 2 pipeline buffers + budget for full-tile f32 intermediates
    # (diff / t / err / mask) + out/acc + headroom.
    vmem_bytes = (2 * 2 * block_bytes + 5 * f32_block_bytes
                  + 4 * acc_rows * LANES * 4 + (2 << 20))
    # Raise above v5e's 16 MiB scoped default; stay inside v7x's 64 MiB VMEM.
    vmem_limit = int(min(max(vmem_bytes, 16 << 20), 48 << 20))

    partials = pl.pallas_call(
        kernel,
        out_shape=jax.ShapeDtypeStruct((num_slices * acc_rows, LANES),
                                       jnp.float32),
        grid_spec=pltpu.PrefetchScalarGridSpec(
            num_scalar_prefetch=0,
            grid=(num_slices, n_inner),
            in_specs=[
                pl.BlockSpec((tile_rows_eff, LANES), in_map),
                pl.BlockSpec((tile_rows_eff, LANES), in_map),
            ],
            out_specs=pl.BlockSpec((acc_rows, LANES), lambda c, i: (c, 0)),
            scratch_shapes=[pltpu.VMEM((acc_rows, LANES), jnp.float32)],
        ),
        compiler_params=pltpu.CompilerParams(
            dimension_semantics=("parallel", "arbitrary"),
            vmem_limit_bytes=vmem_limit,
        ),
    )(x2, y2)

    total = jnp.sum(partials) + tail_sum  # <= 8K-element reduce, negligible
    return total / jnp.float32(n_total)


if __name__ == "__main__":
    key = jax.random.PRNGKey(0)
    kx, ky = jax.random.split(key)

    # 3D-model style input: (N, C, D, H, W)
    shape = (2, 4, 8, 16, 16)
    x = jax.random.normal(kx, shape, dtype=jnp.float32)
    y = jax.random.normal(ky, shape, dtype=jnp.float32)

    loss = l1_charbonnier_loss(x, y)
    loss = jax.block_until_ready(loss)

    # Pure-JAX reference check.
    ref = jnp.mean(jnp.sqrt((x - y) * (x - y) + EPS))
    assert jnp.allclose(loss, ref, rtol=1e-5, atol=1e-6), (loss, ref)

    print("KERNEL_OK")
</pallas_src>

<mosaic_0001>
module attributes {stable_mosaic.version = 11 : i64} {
  func.func @_charbonnier_sum_kernel(%arg0: i32, %arg1: i32, %arg2: memref<128x128xf32, #tpu.memory_space<vmem>>, %arg3: memref<128x128xf32, #tpu.memory_space<vmem>>, %arg4: memref<32x128xf32, #tpu.memory_space<vmem>>, %arg5: memref<32x128xf32, #tpu.memory_space<vmem>>) attributes {dimension_semantics = [#tpu.dimension_semantics<parallel>, #tpu.dimension_semantics<arbitrary>], iteration_bounds = array<i64: 1, 1>, scalar_prefetch = 0 : i64, scratch_operands = 1 : i64, tpu.core_type = #tpu.core_type<tc>, window_params = [{transform_indices = @transform_0, window_bounds = array<i64: 128, 128>}, {transform_indices = @transform_1, window_bounds = array<i64: 128, 128>}, {transform_indices = @transform_2, window_bounds = array<i64: 32, 128>}]} {
    %c0_i32 = arith.constant 0 : i32
    %0 = arith.cmpi eq, %arg1, %c0_i32 : i32
    %1 = arith.extui %0 : i1 to i32
    %c0_i32_0 = arith.constant 0 : i32
    %2 = arith.cmpi ne, %1, %c0_i32_0 : i32
    scf.if %2 {
      %cst_11 = arith.constant 0.000000e+00 : f32
      %19 = vector.broadcast %cst_11 : f32 to vector<32x128xf32>
      %c0_12 = arith.constant 0 : index
      %c0_13 = arith.constant 0 : index
      %20 = vector.load %arg5[%c0_12, %c0_13] : memref<32x128xf32, #tpu.memory_space<vmem>>, vector<32x128xf32>
      tpu.vector_store %arg5[%c0_12, %c0_13], %19 {strides = array<i32>} : memref<32x128xf32, #tpu.memory_space<vmem>>, vector<32x128xf32>,
    } else {
    }
    %c0 = arith.constant 0 : index
    %c0_1 = arith.constant 0 : index
    %3 = vector.load %arg2[%c0, %c0_1] : memref<128x128xf32, #tpu.memory_space<vmem>>, vector<128x128xf32>
    %c0_2 = arith.constant 0 : index
    %c0_3 = arith.constant 0 : index
    %4 = vector.load %arg3[%c0_2, %c0_3] : memref<128x128xf32, #tpu.memory_space<vmem>>, vector<128x128xf32>
    %5 = arith.subf %3, %4 : vector<128x128xf32>
    %6 = arith.mulf %5, %5 : vector<128x128xf32>
    %cst = arith.constant 9.99999997E-7 : f32
    %7 = vector.broadcast %cst : f32 to vector<128x128xf32>
    %8 = arith.addf %6, %7 : vector<128x128xf32>
    %9 = math.rsqrt %8 : vector<128x128xf32>
    %10 = arith.mulf %8, %9 : vector<128x128xf32>
    %c0_4 = arith.constant 0 : index
    %c0_5 = arith.constant 0 : index
    %11 = vector.load %arg5[%c0_4, %c0_5] : memref<32x128xf32, #tpu.memory_space<vmem>>, vector<32x128xf32>
    %12 = vector.shape_cast %10 : vector<128x128xf32> to vector<4x32x128xf32>
    %cst_6 = arith.constant dense<0.000000e+00> : vector<32x128xf32>
    %13 = vector.multi_reduction <add>, %12, %cst_6 [0] : vector<4x32x128xf32> to vector<32x128xf32>
    %14 = arith.addf %11, %13 : vector<32x128xf32>
    %c0_7 = arith.constant 0 : index
    %c0_8 = arith.constant 0 : index
    %15 = vector.load %arg5[%c0_7, %c0_8] : memref<32x128xf32, #tpu.memory_space<vmem>>, vector<32x128xf32>
    tpu.vector_store %arg5[%c0_7, %c0_8], %14 {strides = array<i32>} : memref<32x128xf32, #tpu.memory_space<vmem>>, vector<32x128xf32>,
    %c0_i32_9 = arith.constant 0 : i32
    %16 = arith.cmpi eq, %arg1, %c0_i32_9 : i32
    %17 = arith.extui %16 : i1 to i32
    %c0_i32_10 = arith.constant 0 : i32
    %18 = arith.cmpi ne, %17, %c0_i32_10 : i32
    scf.if %18 {
      %c0_11 = arith.constant 0 : index
      %c0_12 = arith.constant 0 : index
      %19 = vector.load %arg5[%c0_11, %c0_12] : memref<32x128xf32, #tpu.memory_space<vmem>>, vector<32x128xf32>
      %c0_13 = arith.constant 0 : index
      %c0_14 = arith.constant 0 : index
      %20 = vector.load %arg4[%c0_13, %c0_14] : memref<32x128xf32, #tpu.memory_space<vmem>>, vector<32x128xf32>
      tpu.vector_store %arg4[%c0_13, %c0_14], %19 {strides = array<i32>} : memref<32x128xf32, #tpu.memory_space<vmem>>, vector<32x128xf32>,
    } else {
    }
    return
  }
  func.func @transform_0(%arg0: i32, %arg1: i32) -> (i32, i32) {
    %c1_i32 = arith.constant 1 : i32
    %0 = arith.muli %arg0, %c1_i32 : i32
    %1 = arith.addi %0, %arg1 : i32
    %c0_i32 = arith.constant 0 : i32
    %2 = arith.minsi %1, %c0_i32 : i32
    %c0_i32_0 = arith.constant 0 : i32
    %c0_i32_1 = arith.constant 0 : i32
    return %2, %c0_i32_0 : i32, i32
  }
  func.func @transform_1(%arg0: i32, %arg1: i32) -> (i32, i32) {
    %c1_i32 = arith.constant 1 : i32
    %0 = arith.muli %arg0, %c1_i32 : i32
    %1 = arith.addi %0, %arg1 : i32
    %c0_i32 = arith.constant 0 : i32
    %2 = arith.minsi %1, %c0_i32 : i32
    %c0_i32_0 = arith.constant 0 : i32
    %c0_i32_1 = arith.constant 0 : i32
    return %2, %c0_i32_0 : i32, i32
  }
  func.func @transform_2(%arg0: i32, %arg1: i32) -> (i32, i32) {
    %c0_i32 = arith.constant 0 : i32
    %c0_i32_0 = arith.constant 0 : i32
    return %arg0, %c0_i32 : i32, i32
  }
}

</mosaic_0001>

<llo_original>
// kernel: tpu_custom_call.1
$region0: #{tpu_custom_call.1}
  #allocation0 [shape = 'u32[]', space=smem, size = 0x4, offset = 0x4, fixed_abs, tag = 'smem constant byte address 0x4 - core index']
  #allocation1 [shape = 'u32[144,128]{1,0:T(1,128)}', space=vmem, size = 0x12000, scoped, tag = 'internal scratch']
  #allocation2 [shape = 'f32[32,128]{1,0:T(8,128)}', space=vmem, size = 0x4000, scoped, tag = 'scratch operand']
  %s0 = inlined_call_operand.hbm [shape: f32[128,128], index: 0, kind: input, shape index: {}]
  %s1 = inlined_call_operand.hbm [shape: f32[128,128], index: 1, kind: input, shape index: {}]
  %s2 = inlined_call_operand.hbm [shape: f32[32,128], index: 2, kind: output, shape index: {}]
  %s3 = sld [smem:[#allocation0]]
  $region34: #{tpu_custom_call.1} parent=0
    _
  %s5 = ssub.s32 1, %s3
  %s6 = scalar_select 0, %s5, %s3
  $region1: #{tpu_custom_call.1} parent=0
    #allocation3 [shape = 'u8[65536]{0}', space=vmem, size = 0x10000, scoped, tag = 'input window, operand 0, single buffered']
    #allocation4 [shape = 's32[1]{0}', space=sflag, size = 0x4, scoped, tag = 'scoped memory for tpu_custom_call.1']
    #allocation5 [shape = 's32[1]{0}', space=sflag, size = 0x4, scoped, tag = 'scoped memory for tpu_custom_call.1']
    #allocation6 [shape = 'u8[65536]{0}', space=vmem, size = 0x10000, scoped, tag = 'input window, operand 1, single buffered']
    #allocation7 [shape = 's32[1]{0}', space=sflag, size = 0x4, scoped, tag = 'scoped memory for tpu_custom_call.1']
    #allocation8 [shape = 'u8[16384]{0}', space=vmem, size = 0x4000, scoped, tag = 'output window, operand 0, single buffered']
    %7 = vsyncpa [#allocation4], 0
    %8 = vsyncpa [#allocation7], 0
    %9 = vsyncpa [#allocation5], 0
    // Predicated region
    $region2: #{tpu_custom_call.1} parent=1 // pred_check
      _
    $region3: #{tpu_custom_call.1} parent=1 // pred_check_branch
      %11 = sbr.rel (0) target = $region5
    $region4: #{tpu_custom_call.1} parent=1 // pred_region
      %s12 = sadd.s32 0, 0
      %p13 = scmp.lt.s32.totalorder %s12, 0
      %s14 = scalar_select %p13, %s12, 0
      %s15 = smul.u32 16, %s14
      %s17 = ssub.s32 2048, 2048
      %18 = vsyncadd [#allocation4], %s17
      %s19 = smul.addr %s15, 128
      %s20 = scalar_lea.hbm %s0, %s19
      %s21 = sshll.u32 [#allocation3], 4
      %s22 = int_to_ptr.vmem [resolvable:$true] %s21
      %27 = dma.hbm_to_vmem [thread:$0]  %s20, 2048, %s22, [#allocation4], 128, 128, 8
    $region5: #{tpu_custom_call.1} parent=1 // pred_fallthru
      _
    // Predicated region
    $region6: #{tpu_custom_call.1} parent=1 // pred_check
      _
    $region7: #{tpu_custom_call.1} parent=1 // pred_check_branch
      %29 = sbr.rel (0) target = $region9
    $region8: #{tpu_custom_call.1} parent=1 // pred_region
      %s30 = sadd.s32 0, 0
      %p31 = scmp.lt.s32.totalorder %s30, 0
      %s32 = scalar_select %p31, %s30, 0
      %s33 = smul.u32 16, %s32
      %s35 = ssub.s32 2048, 2048
      %36 = vsyncadd [#allocation7], %s35
      %s37 = smul.addr %s33, 128
      %s38 = scalar_lea.hbm %s1, %s37
      %s39 = sshll.u32 [#allocation6], 4
      %s40 = int_to_ptr.vmem [resolvable:$true] %s39
      %45 = dma.hbm_to_vmem [thread:$0]  %s38, 2048, %s40, [#allocation7], 128, 128, 8
    $region9: #{tpu_custom_call.1} parent=1 // pred_fallthru
      _
    // Predicated region
    $region10: #{tpu_custom_call.1} parent=1 // pred_check
      _
    $region11: #{tpu_custom_call.1} parent=1 // pred_check_branch
      %47 = sbr.rel (0) target = $region13
    $region12: #{tpu_custom_call.1} parent=1 // pred_region
      %48 = dma.done [#allocation4], 2048
    $region13: #{tpu_custom_call.1} parent=1 // pred_fallthru
      _
    // Predicated region
    $region14: #{tpu_custom_call.1} parent=1 // pred_check
      _
    $region15: #{tpu_custom_call.1} parent=1 // pred_check_branch
      %50 = sbr.rel (0) target = $region17
    $region16: #{tpu_custom_call.1} parent=1 // pred_region
      %51 = dma.done [#allocation7], 2048
    $region17: #{tpu_custom_call.1} parent=1 // pred_fallthru
      _
    %s52 = sadd.s32 0, 0
    %p53 = scmp.lt.s32.totalorder %s52, 0
    %s54 = scalar_select %p53, %s52, 0
    %s55 = smul.u32 16, %s54
    %s56 = sadd.s32 0, 0
    %p57 = scmp.lt.s32.totalorder %s56, 0
    %s58 = scalar_select %p57, %s56, 0
    %s59 = smul.u32 16, %s58
    %p60 = scmp.eq.s32.totalorder 0, 0
    // Predicated region
    $region18: #{tpu_custom_call.1} parent=1 // pred_check
      %p61 = pneg %p60
    $region19: #{tpu_custom_call.1} parent=1 // pred_check_branch
      %63 = sbr.rel (%p61) target = $region21
    $region20: #{tpu_custom_call.1} parent=1 // pred_region
      %64 = vst [vmem:[#allocation2] sm:$0xff] 0.0
      %65 = vst [vmem:[#allocation2 + $0x8] sm:$0xff] 0.0
      %66 = vst [vmem:[#allocation2 + $0x10] sm:$0xff] 0.0
      %67 = vst [vmem:[#allocation2 + $0x18] sm:$0xff] 0.0
    $region21: #{tpu_custom_call.1} parent=1 // pred_fallthru
      _
    %v68 = vld [vmem:[#allocation3] sm:$0xff]
    %v69 = vld [vmem:[#allocation3 + $0x8] sm:$0xff]
    %v70 = vld [vmem:[#allocation3 + $0x10] sm:$0xff]
    %v71 = vld [vmem:[#allocation3 + $0x18] sm:$0xff]
    %v72 = vld [vmem:[#allocation3 + $0x20] sm:$0xff]
    %v73 = vld [vmem:[#allocation3 + $0x28] sm:$0xff]
    %v74 = vld [vmem:[#allocation3 + $0x30] sm:$0xff]
    %v75 = vld [vmem:[#allocation3 + $0x38] sm:$0xff]
    %v76 = vld [vmem:[#allocation3 + $0x40] sm:$0xff]
    %v77 = vld [vmem:[#allocation3 + $0x48] sm:$0xff]
    %v78 = vld [vmem:[#allocation3 + $0x50] sm:$0xff]
    %v79 = vld [vmem:[#allocation3 + $0x58] sm:$0xff]
    %v80 = vld [vmem:[#allocation3 + $0x60] sm:$0xff]
    %v81 = vld [vmem:[#allocation3 + $0x68] sm:$0xff]
    %v82 = vld [vmem:[#allocation3 + $0x70] sm:$0xff]
    %v83 = vld [vmem:[#allocation3 + $0x78] sm:$0xff]
    %v84 = vld [vmem:[#allocation6] sm:$0xff]
    %v85 = vld [vmem:[#allocation6 + $0x8] sm:$0xff]
    %v86 = vld [vmem:[#allocation6 + $0x10] sm:$0xff]
    %v87 = vld [vmem:[#allocation6 + $0x18] sm:$0xff]
    %v88 = vld [vmem:[#allocation6 + $0x20] sm:$0xff]
    %v89 = vld [vmem:[#allocation6 + $0x28] sm:$0xff]
    %v90 = vld [vmem:[#allocation6 + $0x30] sm:$0xff]
    %v91 = vld [vmem:[#allocation6 + $0x38] sm:$0xff]
    %v92 = vld [vmem:[#allocation6 + $0x40] sm:$0xff]
    %v93 = vld [vmem:[#allocation6 + $0x48] sm:$0xff]
    %v94 = vld [vmem:[#allocation6 + $0x50] sm:$0xff]
    %v95 = vld [vmem:[#allocation6 + $0x58] sm:$0xff]
    %v96 = vld [vmem:[#allocation6 + $0x60] sm:$0xff]
    %v97 = vld [vmem:[#allocation6 + $0x68] sm:$0xff]
    %v98 = vld [vmem:[#allocation6 + $0x70] sm:$0xff]
    %v99 = vld [vmem:[#allocation6 + $0x78] sm:$0xff]
    %v100 = vsub.f32 %v68, %v84
    %v101 = vsub.f32 %v69, %v85
    %v102 = vsub.f32 %v70, %v86
    %v103 = vsub.f32 %v71, %v87
    %v104 = vsub.f32 %v72, %v88
    %v105 = vsub.f32 %v73, %v89
    %v106 = vsub.f32 %v74, %v90
    %v107 = vsub.f32 %v75, %v91
    %v108 = vsub.f32 %v76, %v92
    %v109 = vsub.f32 %v77, %v93
    %v110 = vsub.f32 %v78, %v94
    %v111 = vsub.f32 %v79, %v95
    %v112 = vsub.f32 %v80, %v96
    %v113 = vsub.f32 %v81, %v97
    %v114 = vsub.f32 %v82, %v98
    %v115 = vsub.f32 %v83, %v99
    %v116 = vmul.f32 %v100, %v100
    %v117 = vmul.f32 %v101, %v101
    %v118 = vmul.f32 %v102, %v102
    %v119 = vmul.f32 %v103, %v103
    %v120 = vmul.f32 %v104, %v104
    %v121 = vmul.f32 %v105, %v105
    %v122 = vmul.f32 %v106, %v106
    %v123 = vmul.f32 %v107, %v107
    %v124 = vmul.f32 %v108, %v108
    %v125 = vmul.f32 %v109, %v109
    %v126 = vmul.f32 %v110, %v110
    %v127 = vmul.f32 %v111, %v111
    %v128 = vmul.f32 %v112, %v112
    %v129 = vmul.f32 %v113, %v113
    %v130 = vmul.f32 %v114, %v114
    %v131 = vmul.f32 %v115, %v115
    %v132 = vadd.f32 %v116, 1e-06
    %v133 = vadd.f32 %v117, 1e-06
    %v134 = vadd.f32 %v118, 1e-06
    %v135 = vadd.f32 %v119, 1e-06
    %v136 = vadd.f32 %v120, 1e-06
    %v137 = vadd.f32 %v121, 1e-06
    %v138 = vadd.f32 %v122, 1e-06
    %v139 = vadd.f32 %v123, 1e-06
    %v140 = vadd.f32 %v124, 1e-06
    %v141 = vadd.f32 %v125, 1e-06
    %v142 = vadd.f32 %v126, 1e-06
    %v143 = vadd.f32 %v127, 1e-06
    %v144 = vadd.f32 %v128, 1e-06
    %v145 = vadd.f32 %v129, 1e-06
    %v146 = vadd.f32 %v130, 1e-06
    %v147 = vadd.f32 %v131, 1e-06
    %v148 = vrsqrt.pop %v132
    %v149 = vrsqrt.pop %v133
    %v150 = vrsqrt.pop %v134
    %v151 = vrsqrt.pop %v135
    %v152 = vrsqrt.pop %v136
    %v153 = vrsqrt.pop %v137
    %v154 = vrsqrt.pop %v138
    %v155 = vrsqrt.pop %v139
    %v156 = vrsqrt.pop %v140
    %v157 = vrsqrt.pop %v141
    %v158 = vrsqrt.pop %v142
    %v159 = vrsqrt.pop %v143
    %v160 = vrsqrt.pop %v144
    %v161 = vrsqrt.pop %v145
    %v162 = vrsqrt.pop %v146
    %v163 = vrsqrt.pop %v147
    %v164 = vmul.f32 %v132, %v148
    %v165 = vmul.f32 %v133, %v149
    %v166 = vmul.f32 %v134, %v150
    %v167 = vmul.f32 %v135, %v151
    %v168 = vmul.f32 %v136, %v152
    %v169 = vmul.f32 %v137, %v153
    %v170 = vmul.f32 %v138, %v154
    %v171 = vmul.f32 %v139, %v155
    %v172 = vmul.f32 %v140, %v156
    %v173 = vmul.f32 %v141, %v157
    %v174 = vmul.f32 %v142, %v158
    %v175 = vmul.f32 %v143, %v159
    %v176 = vmul.f32 %v144, %v160
    %v177 = vmul.f32 %v145, %v161
    %v178 = vmul.f32 %v146, %v162
    %v179 = vmul.f32 %v147, %v163
    %v180 = vld [vmem:[#allocation2] sm:$0xff]
    %v181 = vld [vmem:[#allocation2 + $0x8] sm:$0xff]
    %v182 = vld [vmem:[#allocation2 + $0x10] sm:$0xff]
    %v183 = vld [vmem:[#allocation2 + $0x18] sm:$0xff]
    %v184 = vadd.f32 %v164, %v168
    %v185 = vadd.f32 %v184, %v172
    %v186 = vadd.f32 %v185, %v176
    %v187 = vadd.f32 %v165, %v169
    %v188 = vadd.f32 %v187, %v173
    %v189 = vadd.f32 %v188, %v177
    %v190 = vadd.f32 %v166, %v170
    %v191 = vadd.f32 %v190, %v174
    %v192 = vadd.f32 %v191, %v178
    %v193 = vadd.f32 %v167, %v171
    %v194 = vadd.f32 %v193, %v175
    %v195 = vadd.f32 %v194, %v179
    %v196 = vadd.f32 %v180, %v186
    %v197 = vadd.f32 %v181, %v189
    %v198 = vadd.f32 %v182, %v192
    %v199 = vadd.f32 %v183, %v195
    %200 = vst [vmem:[#allocation2] sm:$0xff] %v196
    %201 = vst [vmem:[#allocation2 + $0x8] sm:$0xff] %v197
    %202 = vst [vmem:[#allocation2 + $0x10] sm:$0xff] %v198
    %203 = vst [vmem:[#allocation2 + $0x18] sm:$0xff] %v199
    // Predicated region
    $region22: #{tpu_custom_call.1} parent=1 // pred_check
      %p204 = pneg %p60
    $region23: #{tpu_custom_call.1} parent=1 // pred_check_branch
      %206 = sbr.rel (%p204) target = $region25
    $region24: #{tpu_custom_call.1} parent=1 // pred_region
      %v207 = vld [vmem:[#allocation2] sm:$0xff]
      %v208 = vld [vmem:[#allocation2 + $0x8] sm:$0xff]
      %v209 = vld [vmem:[#allocation2 + $0x10] sm:$0xff]
      %v210 = vld [vmem:[#allocation2 + $0x18] sm:$0xff]
      %211 = vst [vmem:[#allocation8] sm:$0xff] %v207
      %212 = vst [vmem:[#allocation8 + $0x8] sm:$0xff] %v208
      %213 = vst [vmem:[#allocation8 + $0x10] sm:$0xff] %v209
      %214 = vst [vmem:[#allocation8 + $0x18] sm:$0xff] %v210
    $region25: #{tpu_custom_call.1} parent=1 // pred_fallthru
      _
    // Predicated region
    $region26: #{tpu_custom_call.1} parent=1 // pred_check
      _
    $region27: #{tpu_custom_call.1} parent=1 // pred_check_branch
      %216 = sbr.rel (0) target = $region29
    $region28: #{tpu_custom_call.1} parent=1 // pred_region
      %s218 = ssub.s32 512, 512
      %219 = vsyncadd [#allocation5], %s218
      %s220 = sshll.u32 [#allocation8], 4
      %s221 = int_to_ptr.vmem [resolvable:$true] %s220
      %226 = dma.vmem_to_hbm [thread:$0]  %s221, 512, %s2, [#allocation5], 128, 128, 8
    $region29: #{tpu_custom_call.1} parent=1 // pred_fallthru
      _
    // Predicated region
    $region30: #{tpu_custom_call.1} parent=1 // pred_check
      _
    $region31: #{tpu_custom_call.1} parent=1 // pred_check_branch
      %228 = sbr.rel (0) target = $region33
    $region32: #{tpu_custom_call.1} parent=1 // pred_region
      %229 = dma.done [#allocation5], 512
    $region33: #{tpu_custom_call.1} parent=1 // pred_fallthru
      _
    %230 = vsyncpa [#allocation4], 1
    %231 = vsyncpa [#allocation7], 1
    %232 = vsyncpa [#allocation5], 1

</llo_original>
